<compile_context>
chip_gen: v6e
topology: v6e:2x2x1
jax: 0.10.0
libtpu: 0.0.40
codegen_flags: <defaults>
</compile_context>

<pallas_src>
import functools

import jax
import jax.numpy as jnp
from jax.experimental import pallas as pl
from jax.experimental.pallas import tpu as pltpu


def _round_up(x, m):
    return ((x + m - 1) // m) * m


def actor_kernel(s_ref, w1_ref, b1_ref, w2_ref, b2_ref, u_ref):
    # fc: (TB, state_dim) @ (state_dim, h) on the MXU; bf16 operands, f32 acc.
    s = s_ref[...].astype(jnp.bfloat16)
    x = jnp.dot(s, w1_ref[...], preferred_element_type=jnp.float32)   # (TB, h) f32
    x = jnp.maximum(x + b1_ref[...], 0.0)                             # ReLU + bias (f32, VPU)
    # mu_head: (TB, h) @ (h, n_pad); w2 zero-padded to 128 lanes at prep time.
    u = jnp.dot(x.astype(jnp.bfloat16), w2_ref[...],
                preferred_element_type=jnp.float32)                   # (TB, n_pad) f32
    u = 2.0 * jnp.tanh(u + b2_ref[...])                               # f32 tanh (EUP)
    # Store only the real action columns -> no padded HBM writeback.
    u_ref[...] = u[:, : u_ref.shape[-1]]


@functools.partial(jax.jit, static_argnames=("action_dim", "tb"))
def actor_forward(s, w1, b1, w2p, b2p, *, action_dim, tb=1024):
    """s: (B, state_dim) f32. Weights from prepare_params. Returns (B, action_dim) f32."""
    B, state_dim = s.shape
    h_dim = w1.shape[1]
    n_pad = w2p.shape[1]

    # Batch tiling: TB a multiple of 8 sublanes; avoid padding when tb divides B.
    b8 = _round_up(max(B, 8), 8)
    tb_eff = min(tb, b8)
    b_pad = _round_up(b8, tb_eff)
    if b_pad != B:
        sp = jnp.zeros((b_pad, state_dim), s.dtype).at[:B].set(s)
    else:
        sp = s

    grid = (b_pad // tb_eff,)

    out = pl.pallas_call(
        actor_kernel,
        out_shape=jax.ShapeDtypeStruct((b_pad, action_dim), jnp.float32),
        grid_spec=pltpu.PrefetchScalarGridSpec(
            num_scalar_prefetch=0,
            grid=grid,
            in_specs=[
                # Batch tile of states: pipelined across the grid.
                pl.BlockSpec((tb_eff, state_dim), lambda i: (i, 0)),
                # Weights/biases: same block every step -> VMEM-resident, no re-DMA.
                pl.BlockSpec((state_dim, h_dim), lambda i: (0, 0)),
                pl.BlockSpec((1, h_dim), lambda i: (0, 0)),
                pl.BlockSpec((h_dim, n_pad), lambda i: (0, 0)),
                pl.BlockSpec((1, n_pad), lambda i: (0, 0)),
            ],
            # Unpadded output block: last dim == full array dim (legal), so the
            # store is a small masked vst but total HBM traffic is 16x smaller.
            out_specs=pl.BlockSpec((tb_eff, action_dim), lambda i: (i, 0)),
        ),
        compiler_params=pltpu.CompilerParams(
            dimension_semantics=("parallel",)),
    )(sp, w1, b1, w2p, b2p)

    return out[:B] if b_pad != B else out


def prepare_params(w1, b1, w2, b2, *, lane=128):
    """One-time parameter prep (hoisted out of the forward call):
    weights -> bf16 (MXU-native), mu_head weight/bias zero-padded to a
    128-lane multiple so the second matmul stays lane-aligned in VMEM.
    Biases stay f32 (added post-accumulation)."""
    h_dim, action_dim = w2.shape
    n_pad = _round_up(max(action_dim, lane), lane)
    w2p = jnp.zeros((h_dim, n_pad), jnp.bfloat16).at[:, :action_dim].set(
        w2.astype(jnp.bfloat16))
    b2p = jnp.zeros((1, n_pad), jnp.float32).at[:, :action_dim].set(
        b2.astype(jnp.float32).reshape(1, -1))
    w1p = w1.astype(jnp.bfloat16)
    b1p = b1.astype(jnp.float32).reshape(1, -1)
    return w1p, b1p, w2p, b2p, action_dim


def init_params(key, state_dim, h, action_dim):
    """Deterministic synthetic init (PyTorch-Linear-like uniform fan-in).
    Stored as (in, out) so the kernel computes x @ W + b directly."""
    k1, k2, k3, k4 = jax.random.split(key, 4)
    lim1 = 1.0 / jnp.sqrt(jnp.float32(state_dim))
    lim2 = 1.0 / jnp.sqrt(jnp.float32(h))
    w1 = jax.random.uniform(k1, (state_dim, h), jnp.float32, -lim1, lim1)
    b1 = jax.random.uniform(k2, (1, h), jnp.float32, -lim1, lim1)
    w2 = jax.random.uniform(k3, (h, action_dim), jnp.float32, -lim2, lim2)
    b2 = jax.random.uniform(k4, (1, action_dim), jnp.float32, -lim2, lim2)
    return w1, b1, w2, b2


def _reference_f32(s, w1, b1, w2, b2):
    x = jnp.maximum(s @ w1 + b1, 0.0)
    return 2.0 * jnp.tanh(x @ w2 + b2)


def _reference_bf16(s, w1, b1, w2, b2):
    # Same bf16-operand / f32-accumulate recipe as the kernel.
    x = jnp.dot(s.astype(jnp.bfloat16), w1.astype(jnp.bfloat16),
                preferred_element_type=jnp.float32) + b1
    x = jnp.maximum(x, 0.0)
    u = jnp.dot(x.astype(jnp.bfloat16), w2.astype(jnp.bfloat16),
                preferred_element_type=jnp.float32) + b2
    return 2.0 * jnp.tanh(u)


if __name__ == "__main__":
    h = 512
    state_dim = 16
    action_dim = 8

    key = jax.random.PRNGKey(0)
    k_s, k_s2, k_p = jax.random.split(key, 3)
    w1, b1, w2, b2 = init_params(k_p, state_dim, h, action_dim)
    w1p, b1p, w2p, b2p, n_act = prepare_params(w1, b1, w2, b2)

    # Small single-tile case (B=8 -> one grid step, no batch padding).
    s_small = jax.random.normal(k_s, (8, state_dim), jnp.float32)
    u_small = actor_forward(s_small, w1p, b1p, w2p, b2p, action_dim=n_act)
    jax.block_until_ready(u_small)
    assert u_small.shape == (8, action_dim)
    assert jnp.allclose(u_small, _reference_bf16(s_small, w1, b1, w2, b2),
                        atol=2e-3, rtol=2e-3)
    assert jnp.allclose(u_small, _reference_f32(s_small, w1, b1, w2, b2),
                        atol=6e-2, rtol=6e-2)

    # Batched case: 2048 rows -> 2 grid steps of tb=1024 ("parallel" batch axis
    # can shard across both TensorCores on v7x; weights stay VMEM-resident).
    s_big = jax.random.normal(k_s2, (2048, state_dim), jnp.float32)
    u_big = actor_forward(s_big, w1p, b1p, w2p, b2p, action_dim=n_act, tb=1024)
    jax.block_until_ready(u_big)
    assert u_big.shape == (2048, action_dim)
    assert jnp.allclose(u_big, _reference_bf16(s_big, w1, b1, w2, b2),
                        atol=2e-3, rtol=2e-3)

    # TODO(synk): the l2/dropout branch is dead code (intermediate_layer=False)
    # and stochastic dropout is not implemented in the kernel.
    print("KERNEL_OK")
</pallas_src>

<mosaic_0001>
module attributes {stable_mosaic.version = 11 : i64} {
  func.func @actor_kernel(%arg0: i32, %arg1: memref<8x16xf32, #tpu.memory_space<vmem>>, %arg2: memref<16x512xbf16, #tpu.memory_space<vmem>>, %arg3: memref<1x512xf32, #tpu.memory_space<vmem>>, %arg4: memref<512x128xbf16, #tpu.memory_space<vmem>>, %arg5: memref<1x128xf32, #tpu.memory_space<vmem>>, %arg6: memref<8x8xf32, #tpu.memory_space<vmem>>) attributes {dimension_semantics = [#tpu.dimension_semantics<parallel>], iteration_bounds = array<i64: 1>, scalar_prefetch = 0 : i64, scratch_operands = 0 : i64, tpu.core_type = #tpu.core_type<tc>, window_params = [{transform_indices = @transform_0, window_bounds = array<i64: 8, 16>}, {pipeline_mode = #tpu.pipeline_mode<synchronous>, transform_indices = @transform_1, window_bounds = array<i64: 16, 512>}, {pipeline_mode = #tpu.pipeline_mode<synchronous>, transform_indices = @transform_2, window_bounds = array<i64: 1, 512>}, {pipeline_mode = #tpu.pipeline_mode<synchronous>, transform_indices = @transform_3, window_bounds = array<i64: 512, 128>}, {pipeline_mode = #tpu.pipeline_mode<synchronous>, transform_indices = @transform_4, window_bounds = array<i64: 1, 128>}, {transform_indices = @transform_5, window_bounds = array<i64: 8, 8>}]} {
    %c0 = arith.constant 0 : index
    %c0_0 = arith.constant 0 : index
    %0 = vector.load %arg1[%c0, %c0_0] : memref<8x16xf32, #tpu.memory_space<vmem>>, vector<8x16xf32>
    %1 = arith.truncf %0 : vector<8x16xf32> to vector<8x16xbf16>
    %c0_1 = arith.constant 0 : index
    %c0_2 = arith.constant 0 : index
    %2 = vector.load %arg2[%c0_1, %c0_2] : memref<16x512xbf16, #tpu.memory_space<vmem>>, vector<16x512xbf16>
    %cst = arith.constant dense<0.000000e+00> : vector<8x512xf32>
    %3 = tpu.matmul %1, %2, %cst {dimension_numbers = #tpu.dot_dimension_numbers<[1], [0], [0], [1], [0, 0, 1, 1], [], []>} : vector<8x16xbf16>, vector<16x512xbf16>, vector<8x512xf32> -> vector<8x512xf32>
    %c0_3 = arith.constant 0 : index
    %c0_4 = arith.constant 0 : index
    %4 = vector.load %arg3[%c0_3, %c0_4] : memref<1x512xf32, #tpu.memory_space<vmem>>, vector<1x512xf32>
    %5 = vector.broadcast %4 : vector<1x512xf32> to vector<8x512xf32>
    %6 = arith.addf %3, %5 : vector<8x512xf32>
    %cst_5 = arith.constant 0.000000e+00 : f32
    %7 = vector.broadcast %cst_5 : f32 to vector<8x512xf32>
    %8 = arith.maximumf %6, %7 : vector<8x512xf32>
    %9 = arith.truncf %8 : vector<8x512xf32> to vector<8x512xbf16>
    %c0_6 = arith.constant 0 : index
    %c0_7 = arith.constant 0 : index
    %10 = vector.load %arg4[%c0_6, %c0_7] : memref<512x128xbf16, #tpu.memory_space<vmem>>, vector<512x128xbf16>
    %cst_8 = arith.constant dense<0.000000e+00> : vector<8x128xf32>
    %11 = tpu.matmul %9, %10, %cst_8 {dimension_numbers = #tpu.dot_dimension_numbers<[1], [0], [0], [1], [0, 0, 1, 1], [], []>} : vector<8x512xbf16>, vector<512x128xbf16>, vector<8x128xf32> -> vector<8x128xf32>
    %c0_9 = arith.constant 0 : index
    %c0_10 = arith.constant 0 : index
    %12 = vector.load %arg5[%c0_9, %c0_10] : memref<1x128xf32, #tpu.memory_space<vmem>>, vector<1x128xf32>
    %13 = vector.broadcast %12 : vector<1x128xf32> to vector<8x128xf32>
    %14 = arith.addf %11, %13 : vector<8x128xf32>
    %15 = math.tanh %14 : vector<8x128xf32>
    %cst_11 = arith.constant 2.000000e+00 : f32
    %16 = vector.broadcast %cst_11 : f32 to vector<8x128xf32>
    %17 = arith.mulf %16, %15 : vector<8x128xf32>
    %18 = vector.extract_strided_slice %17 {offsets = [0, 0], sizes = [8, 8], strides = [1, 1]} : vector<8x128xf32> to vector<8x8xf32>
    %c0_12 = arith.constant 0 : index
    %c0_13 = arith.constant 0 : index
    %19 = vector.load %arg6[%c0_12, %c0_13] : memref<8x8xf32, #tpu.memory_space<vmem>>, vector<8x8xf32>
    tpu.vector_store %arg6[%c0_12, %c0_13], %18 {strides = array<i32>} : memref<8x8xf32, #tpu.memory_space<vmem>>, vector<8x8xf32>,
    return
  }
  func.func @transform_0(%arg0: i32) -> (i32, i32) {
    %c0_i32 = arith.constant 0 : i32
    %c0_i32_0 = arith.constant 0 : i32
    return %arg0, %c0_i32 : i32, i32
  }
  func.func @transform_1(%arg0: i32) -> (i32, i32) {
    %c0_i32 = arith.constant 0 : i32
    %c0_i32_0 = arith.constant 0 : i32
    %c0_i32_1 = arith.constant 0 : i32
    return %c0_i32, %c0_i32_0 : i32, i32
  }
  func.func @transform_2(%arg0: i32) -> (i32, i32) {
    %c0_i32 = arith.constant 0 : i32
    %c0_i32_0 = arith.constant 0 : i32
    %c0_i32_1 = arith.constant 0 : i32
    return %c0_i32, %c0_i32_0 : i32, i32
  }
  func.func @transform_3(%arg0: i32) -> (i32, i32) {
    %c0_i32 = arith.constant 0 : i32
    %c0_i32_0 = arith.constant 0 : i32
    %c0_i32_1 = arith.constant 0 : i32
    return %c0_i32, %c0_i32_0 : i32, i32
  }
  func.func @transform_4(%arg0: i32) -> (i32, i32) {
    %c0_i32 = arith.constant 0 : i32
    %c0_i32_0 = arith.constant 0 : i32
    %c0_i32_1 = arith.constant 0 : i32
    return %c0_i32, %c0_i32_0 : i32, i32
  }
  func.func @transform_5(%arg0: i32) -> (i32, i32) {
    %c0_i32 = arith.constant 0 : i32
    %c0_i32_0 = arith.constant 0 : i32
    return %arg0, %c0_i32 : i32, i32
  }
}

</mosaic_0001>

<llo_original>
// kernel: actor_forward.1
$region0: #{actor_forward.1}
  #allocation0 [shape = 'u32[]', space=smem, size = 0x4, offset = 0x4, fixed_abs, tag = 'smem constant byte address 0x4 - core index']
  #allocation1 [shape = 'u32[144,128]{1,0:T(1,128)}', space=vmem, size = 0x12000, scoped, tag = 'internal scratch']
  %s0 = inlined_call_operand.hbm [shape: f32[8,16], index: 0, kind: input, shape index: {}]
  %s1 = inlined_call_operand.hbm [shape: bf16[16,512], index: 1, kind: input, shape index: {}]
  %s2 = inlined_call_operand.hbm [shape: f32[1,512], index: 2, kind: input, shape index: {}]
  %s3 = inlined_call_operand.hbm [shape: bf16[512,128], index: 3, kind: input, shape index: {}]
  %s4 = inlined_call_operand.vmem [shape: f32[1,128], index: 4, kind: input, shape index: {}]
  %s5 = inlined_call_operand.hbm [shape: f32[8,8], index: 5, kind: output, shape index: {}]
  %s6 = sld [smem:[#allocation0]]
  $region46: #{actor_forward.1} parent=0
    _
  %s8 = ssub.s32 1, %s6
  %s9 = scalar_select 0, %s8, %s6
  $region1: #{actor_forward.1} parent=0
    #allocation2 [shape = 'u8[4096]{0}', space=vmem, size = 0x1000, scoped, tag = 'input window, operand 0, single buffered']
    #allocation3 [shape = 's32[1]{0}', space=sflag, size = 0x4, scoped, tag = 'scoped memory for actor_forward.1']
    #allocation4 [shape = 's32[1]{0}', space=sflag, size = 0x4, scoped, tag = 'scoped memory for actor_forward.1']
    #allocation5 [shape = 'u8[16384]{0}', space=vmem, size = 0x4000, scoped, tag = 'input window, operand 1, single buffered']
    #allocation6 [shape = 's32[1]{0}', space=sflag, size = 0x4, scoped, tag = 'scoped memory for actor_forward.1']
    #allocation7 [shape = 'u8[2048]{0}', space=vmem, size = 0x800, scoped, tag = 'input window, operand 2, single buffered']
    #allocation8 [shape = 'u8[131072]{0}', space=vmem, size = 0x20000, scoped, tag = 'input window, operand 3, single buffered']
    #allocation9 [shape = 's32[1]{0}', space=sflag, size = 0x4, scoped, tag = 'scoped memory for actor_forward.1']
    #allocation10 [shape = 'u8[4096]{0}', space=vmem, size = 0x1000, scoped, tag = 'output window, operand 0, single buffered']
    %10 = vsyncpa [#allocation3], 0
    %11 = vsyncpa [#allocation6], 0
    %12 = vsyncpa [#allocation9], 0
    %13 = vsyncpa [#allocation4], 0
    // Predicated region
    $region2: #{actor_forward.1} parent=1 // pred_check
      _
    $region3: #{actor_forward.1} parent=1 // pred_check_branch
      %15 = sbr.rel (0) target = $region5
    $region4: #{actor_forward.1} parent=1 // pred_region
      %s17 = ssub.s32 128, 128
      %18 = vsyncadd [#allocation3], %s17
      %s20 = sshll.u32 [#allocation2], 4
      %s21 = int_to_ptr.vmem [resolvable:$true] %s20
      %23 = dma.hbm_to_vmem [thread:$0]  %s0, 128, %s21, [#allocation3]
    $region5: #{actor_forward.1} parent=1 // pred_fallthru
      _
    // Predicated region
    $region6: #{actor_forward.1} parent=1 // pred_check
      _
    $region7: #{actor_forward.1} parent=1 // pred_check_branch
      %25 = sbr.rel (0) target = $region9
    $region8: #{actor_forward.1} parent=1 // pred_region
      %s27 = ssub.s32 512, 512
      %28 = vsyncadd [#allocation6], %s27
      %s29 = sshll.u32 [#allocation5], 4
      %s30 = int_to_ptr.vmem [resolvable:$true] %s29
      %35 = dma.hbm_to_vmem [thread:$0]  %s1, 512, %s30, [#allocation6], 256, 256, 16
    $region9: #{actor_forward.1} parent=1 // pred_fallthru
      _
    // Predicated region
    $region10: #{actor_forward.1} parent=1 // pred_check
      _
    $region11: #{actor_forward.1} parent=1 // pred_check_branch
      %37 = sbr.rel (0) target = $region13
    $region12: #{actor_forward.1} parent=1 // pred_region
      %s39 = ssub.s32 64, 64
      %40 = vsyncadd [#allocation6], %s39
      %s42 = sshll.u32 [#allocation7], 4
      %s43 = int_to_ptr.vmem [resolvable:$true] %s42
      %45 = dma.hbm_to_vmem [thread:$0]  %s2, 64, %s43, [#allocation6]
    $region13: #{actor_forward.1} parent=1 // pred_fallthru
      _
    // Predicated region
    $region14: #{actor_forward.1} parent=1 // pred_check
      _
    $region15: #{actor_forward.1} parent=1 // pred_check_branch
      %47 = sbr.rel (0) target = $region17
    $region16: #{actor_forward.1} parent=1 // pred_region
      %s49 = ssub.s32 4096, 4096
      %50 = vsyncadd [#allocation9], %s49
      %s51 = sshll.u32 [#allocation8], 4
      %s52 = int_to_ptr.vmem [resolvable:$true] %s51
      %57 = dma.hbm_to_vmem [thread:$0]  %s3, 4096, %s52, [#allocation9], 64, 64, 4
    $region17: #{actor_forward.1} parent=1 // pred_fallthru
      _
    // Predicated region
    $region18: #{actor_forward.1} parent=1 // pred_check
      _
    $region19: #{actor_forward.1} parent=1 // pred_check_branch
      %59 = sbr.rel (0) target = $region21
    $region20: #{actor_forward.1} parent=1 // pred_region
      _
    $region21: #{actor_forward.1} parent=1 // pred_fallthru
      _
    // Predicated region
    $region22: #{actor_forward.1} parent=1 // pred_check
      _
    $region23: #{actor_forward.1} parent=1 // pred_check_branch
      %61 = sbr.rel (0) target = $region25
    $region24: #{actor_forward.1} parent=1 // pred_region
      %62 = dma.done [#allocation3], 128
    $region25: #{actor_forward.1} parent=1 // pred_fallthru
      _
    // Predicated region
    $region26: #{actor_forward.1} parent=1 // pred_check
      _
    $region27: #{actor_forward.1} parent=1 // pred_check_branch
      %64 = sbr.rel (0) target = $region29
    $region28: #{actor_forward.1} parent=1 // pred_region
      %65 = dma.done [#allocation6], 512
    $region29: #{actor_forward.1} parent=1 // pred_fallthru
      _
    // Predicated region
    $region30: #{actor_forward.1} parent=1 // pred_check
      _
    $region31: #{actor_forward.1} parent=1 // pred_check_branch
      %67 = sbr.rel (0) target = $region33
    $region32: #{actor_forward.1} parent=1 // pred_region
      %68 = dma.done [#allocation6], 64
    $region33: #{actor_forward.1} parent=1 // pred_fallthru
      _
    // Predicated region
    $region34: #{actor_forward.1} parent=1 // pred_check
      _
    $region35: #{actor_forward.1} parent=1 // pred_check_branch
      %70 = sbr.rel (0) target = $region37
    $region36: #{actor_forward.1} parent=1 // pred_region
      %71 = dma.done [#allocation9], 4096
    $region37: #{actor_forward.1} parent=1 // pred_fallthru
      _
    %v73 = vld [vmem:[#allocation2] sm:$0xff]
    %v74 = vpack.c.bf16 %v73, %v73
    %v75 = vld [vmem:[#allocation5] sm:$0xff]
    %v76 = vld [vmem:[#allocation5 + $0x8] sm:$0xff]
    %v77 = vld [vmem:[#allocation5 + $0x10] sm:$0xff]
    %v78 = vld [vmem:[#allocation5 + $0x18] sm:$0xff]
    %v79 = vld [vmem:[#allocation7] sm:$0xf]
    %v81 = vlaneseq
    %v82 = vshrl.u32 %v81, 7
    %v83 = vsub.s32 0, %v82
    %v84 = vrot.slane %v79, %v83
    %v85 = vlaneseq
    %v86 = vshrl.u32 %v85, 7
    %v87 = vsub.s32 1, %v86
    %v88 = vrot.slane %v79, %v87
    %v89 = vlaneseq
    %v90 = vshrl.u32 %v89, 7
    %v91 = vsub.s32 2, %v90
    %v92 = vrot.slane %v79, %v91
    %v93 = vlaneseq
    %v94 = vshrl.u32 %v93, 7
    %v95 = vsub.s32 3, %v94
    %v96 = vrot.slane %v79, %v95
    %v105 = vunpack.c.l.b16 %v75
    %v106 = vunpack.c.h.b16 %v75
    %v107 = vunpack.c.l.b16 %v76
    %v108 = vunpack.c.h.b16 %v76
    %v109 = vunpack.c.l.b16 %v77
    %v110 = vunpack.c.h.b16 %v77
    %v111 = vunpack.c.l.b16 %v78
    %v112 = vunpack.c.h.b16 %v78
    %v113 = vpack.c.b16 %v109, %v105
    %v114 = vpack.c.b16 %v110, %v106
    %v115 = vpack.c.b16 %v111, %v107
    %v116 = vpack.c.b16 %v112, %v108
    %vm121 = vcmask 130048
    %v123 = vsel %vm121, %v74, 0
    %125 = vmatprep.subr.bf16.mxu0 0
    %126 = vmatpush1.bf16.msra.mxu0 0
    %127 = vmatprep.subr.bf16.mxu0 0
    %128 = vmatpush1.bf16.msra.mxu0 0
    %129 = vmatprep.subr.bf16.mxu0 0
    %130 = vmatpush1.bf16.msra.mxu0 0
    %131 = vmatprep.subr.bf16.mxu0 0
    %132 = vmatpush1.bf16.msra.mxu0 0
    %133 = vmatprep.subr.bf16.mxu0 0
    %134 = vmatpush1.bf16.msra.mxu0 0
    %135 = vmatprep.subr.bf16.mxu0 0
    %136 = vmatpush1.bf16.msra.mxu0 0
    %137 = vmatprep.subr.bf16.mxu0 0
    %138 = vmatpush1.bf16.msra.mxu0 0
    %139 = vmatprep.subr.bf16.mxu0 %v114
    %140 = vmatpush1.bf16.msra.mxu0 %v113
    %141 = vmatprep.subr.bf16.mxu0 0
    %142 = vmatpush2.bf16.msra.mxu0 0
    %143 = vmatprep.subr.bf16.mxu0 0
    %144 = vmatpush2.bf16.msra.mxu0 0
    %145 = vmatprep.subr.bf16.mxu0 0
    %146 = vmatpush2.bf16.msra.mxu0 0
    %147 = vmatprep.subr.bf16.mxu0 0
    %148 = vmatpush2.bf16.msra.mxu0 0
    %149 = vmatprep.subr.bf16.mxu0 0
    %150 = vmatpush2.bf16.msra.mxu0 0
    %151 = vmatprep.subr.bf16.mxu0 0
    %152 = vmatpush2.bf16.msra.mxu0 0
    %153 = vmatprep.subr.bf16.mxu0 0
    %154 = vmatpush2.bf16.msra.mxu0 0
    %155 = vmatprep.subr.bf16.mxu0 0
    %156 = vmatpush2.bf16.msra.mxu0 0
    %157 = vmatprep.mubr.bf16.mxu0 0
    %158 = vmatmul.mubr.bf16.gmra.mxu0 %v123
    %v159 = vpop.f32.mrf.mxu0
    %v160 = vadd.f32 %v84, %v159
    %v161 = vpop.f32.mrf.mxu0
    %v162 = vadd.f32 %v88, %v161
    %v163 = vpop.f32.mrf.mxu0
    %v164 = vpop.f32.mrf.mxu0
    %165 = vdwg.mxu0
    %166 = vmatprep.subr.bf16.mxu0 0
    %167 = vmatpush1.bf16.msra.mxu0 0
    %168 = vmatprep.subr.bf16.mxu0 0
    %169 = vmatpush1.bf16.msra.mxu0 0
    %170 = vmatprep.subr.bf16.mxu0 0
    %171 = vmatpush1.bf16.msra.mxu0 0
    %172 = vmatprep.subr.bf16.mxu0 0
    %173 = vmatpush1.bf16.msra.mxu0 0
    %174 = vmatprep.subr.bf16.mxu0 0
    %175 = vmatpush1.bf16.msra.mxu0 0
    %176 = vmatprep.subr.bf16.mxu0 0
    %177 = vmatpush1.bf16.msra.mxu0 0
    %178 = vmatprep.subr.bf16.mxu0 0
    %179 = vmatpush1.bf16.msra.mxu0 0
    %180 = vmatprep.subr.bf16.mxu0 %v116
    %181 = vmatpush1.bf16.msra.mxu0 %v115
    %182 = vmatprep.subr.bf16.mxu0 0
    %183 = vmatpush2.bf16.msra.mxu0 0
    %184 = vmatprep.subr.bf16.mxu0 0
    %185 = vmatpush2.bf16.msra.mxu0 0
    %186 = vmatprep.subr.bf16.mxu0 0
    %187 = vmatpush2.bf16.msra.mxu0 0
    %188 = vmatprep.subr.bf16.mxu0 0
    %189 = vmatpush2.bf16.msra.mxu0 0
    %190 = vmatprep.subr.bf16.mxu0 0
    %191 = vmatpush2.bf16.msra.mxu0 0
    %192 = vmatprep.subr.bf16.mxu0 0
    %193 = vmatpush2.bf16.msra.mxu0 0
    %194 = vmatprep.subr.bf16.mxu0 0
    %195 = vmatpush2.bf16.msra.mxu0 0
    %196 = vmatprep.subr.bf16.mxu0 0
    %197 = vmatpush2.bf16.msra.mxu0 0
    %198 = vmatprep.mubr.bf16.mxu0 0
    %199 = vmatmul.mubr.bf16.gmra.mxu0 %v123
    %v200 = vpop.f32.mrf.mxu0
    %v201 = vadd.f32 %v92, %v200
    %v202 = vpop.f32.mrf.mxu0
    %v203 = vadd.f32 %v96, %v202
    %v204 = vpop.f32.mrf.mxu0
    %v205 = vpop.f32.mrf.mxu0
    %206 = vdwg.mxu0
    %v207 = vmax.f32 %v160, 0.0
    %v208 = vmax.f32 %v162, 0.0
    %v209 = vmax.f32 %v201, 0.0
    %v210 = vmax.f32 %v203, 0.0
    %v211 = vpack.c.bf16 %v207, %v207
    %v212 = vpack.c.bf16 %v208, %v208
    %v213 = vpack.c.bf16 %v209, %v209
    %v214 = vpack.c.bf16 %v210, %v210
    %v215 = vld [vmem:[#allocation8] sm:$0xf]
    %v216 = vld [vmem:[#allocation8 + $0x4] sm:$0xf]
    %v217 = vld [vmem:[#allocation8 + $0x8] sm:$0xf]
    %v218 = vld [vmem:[#allocation8 + $0xc] sm:$0xf]
    %v219 = vld [vmem:[#allocation8 + $0x10] sm:$0xf]
    %v220 = vld [vmem:[#allocation8 + $0x14] sm:$0xf]
    %v221 = vld [vmem:[#allocation8 + $0x18] sm:$0xf]
    %v222 = vld [vmem:[#allocation8 + $0x1c] sm:$0xf]
    %v223 = vld [vmem:[#allocation8 + $0x20] sm:$0xf]
    %v224 = vld [vmem:[#allocation8 + $0x24] sm:$0xf]
    %v225 = vld [vmem:[#allocation8 + $0x28] sm:$0xf]
    %v226 = vld [vmem:[#allocation8 + $0x2c] sm:$0xf]
    %v227 = vld [vmem:[#allocation8 + $0x30] sm:$0xf]
    %v228 = vld [vmem:[#allocation8 + $0x34] sm:$0xf]
    %v229 = vld [vmem:[#allocation8 + $0x38] sm:$0xf]
    %v230 = vld [vmem:[#allocation8 + $0x3c] sm:$0xf]
    %v231 = vld [vmem:[#allocation8 + $0x40] sm:$0xf]
    %v232 = vld [vmem:[#allocation8 + $0x44] sm:$0xf]
    %v233 = vld [vmem:[#allocation8 + $0x48] sm:$0xf]
    %v234 = vld [vmem:[#allocation8 + $0x4c] sm:$0xf]
    %v235 = vld [vmem:[#allocation8 + $0x50] sm:$0xf]
    %v236 = vld [vmem:[#allocation8 + $0x54] sm:$0xf]
    %v237 = vld [vmem:[#allocation8 + $0x58] sm:$0xf]
    %v238 = vld [vmem:[#allocation8 + $0x5c] sm:$0xf]
    %v239 = vld [vmem:[#allocation8 + $0x60] sm:$0xf]
    %v240 = vld [vmem:[#allocation8 + $0x64] sm:$0xf]
    %v241 = vld [vmem:[#allocation8 + $0x68] sm:$0xf]
    %v242 = vld [vmem:[#allocation8 + $0x6c] sm:$0xf]
    %v243 = vld [vmem:[#allocation8 + $0x70] sm:$0xf]
    %v244 = vld [vmem:[#allocation8 + $0x74] sm:$0xf]
    %v245 = vld [vmem:[#allocation8 + $0x78] sm:$0xf]
    %v246 = vld [vmem:[#allocation8 + $0x7c] sm:$0xf]
    %v247 = vld [vmem:[#allocation8 + $0x80] sm:$0xf]
    %v248 = vld [vmem:[#allocation8 + $0x84] sm:$0xf]
    %v249 = vld [vmem:[#allocation8 + $0x88] sm:$0xf]
    %v250 = vld [vmem:[#allocation8 + $0x8c] sm:$0xf]
    %v251 = vld [vmem:[#allocation8 + $0x90] sm:$0xf]
    %v252 = vld [vmem:[#allocation8 + $0x94] sm:$0xf]
    %v253 = vld [vmem:[#allocation8 + $0x98] sm:$0xf]
    %v254 = vld [vmem:[#allocation8 + $0x9c] sm:$0xf]
    %v255 = vld [vmem:[#allocation8 + $0xa0] sm:$0xf]
    %v256 = vld [vmem:[#allocation8 + $0xa4] sm:$0xf]
    %v257 = vld [vmem:[#allocation8 + $0xa8] sm:$0xf]
    %v258 = vld [vmem:[#allocation8 + $0xac] sm:$0xf]
    %v259 = vld [vmem:[#allocation8 + $0xb0] sm:$0xf]
    %v260 = vld [vmem:[#allocation8 + $0xb4] sm:$0xf]
    %v261 = vld [vmem:[#allocation8 + $0xb8] sm:$0xf]
    %v262 = vld [vmem:[#allocation8 + $0xbc] sm:$0xf]
    %v263 = vld [vmem:[#allocation8 + $0xc0] sm:$0xf]
    %v264 = vld [vmem:[#allocation8 + $0xc4] sm:$0xf]
    %v265 = vld [vmem:[#allocation8 + $0xc8] sm:$0xf]
    %v266 = vld [vmem:[#allocation8 + $0xcc] sm:$0xf]
    %v267 = vld [vmem:[#allocation8 + $0xd0] sm:$0xf]
    %v268 = vld [vmem:[#allocation8 + $0xd4] sm:$0xf]
    %v269 = vld [vmem:[#allocation8 + $0xd8] sm:$0xf]
    %v270 = vld [vmem:[#allocation8 + $0xdc] sm:$0xf]
    %v271 = vld [vmem:[#allocation8 + $0xe0] sm:$0xf]
    %v272 = vld [vmem:[#allocation8 + $0xe4] sm:$0xf]
    %v273 = vld [vmem:[#allocation8 + $0xe8] sm:$0xf]
    %v274 = vld [vmem:[#allocation8 + $0xec] sm:$0xf]
    %v275 = vld [vmem:[#allocation8 + $0xf0] sm:$0xf]
    %v276 = vld [vmem:[#allocation8 + $0xf4] sm:$0xf]
    %v277 = vld [vmem:[#allocation8 + $0xf8] sm:$0xf]
    %v278 = vld [vmem:[#allocation8 + $0xfc] sm:$0xf]
    %v279 = vld [vmem:[%s4] sm:$0x1]
    %v281 = vlaneseq
    %v282 = vshrl.u32 %v281, 7
    %v283 = vsub.s32 0, %v282
    %v284 = vrot.slane %v279, %v283
    %v350 = vunpack.c.l.b16 %v215
    %v351 = vunpack.c.l.b16 %v216
    %v352 = vunpack.c.l.b16 %v217
    %v353 = vunpack.c.l.b16 %v218
    %v354 = vunpack.c.l.b16 %v219
    %v355 = vunpack.c.l.b16 %v220
    %v356 = vunpack.c.l.b16 %v221
    %v357 = vunpack.c.l.b16 %v222
    %v358 = vunpack.c.l.b16 %v223
    %v359 = vunpack.c.l.b16 %v224
    %v360 = vunpack.c.l.b16 %v225
    %v361 = vunpack.c.l.b16 %v226
    %v362 = vunpack.c.l.b16 %v227
    %v363 = vunpack.c.l.b16 %v228
    %v364 = vunpack.c.l.b16 %v229
    %v365 = vunpack.c.l.b16 %v230
    %v366 = vunpack.c.l.b16 %v231
    %v367 = vunpack.c.l.b16 %v232
    %v368 = vunpack.c.l.b16 %v233
    %v369 = vunpack.c.l.b16 %v234
    %v370 = vunpack.c.l.b16 %v235
    %v371 = vunpack.c.l.b16 %v236
    %v372 = vunpack.c.l.b16 %v237
    %v373 = vunpack.c.l.b16 %v238
    %v374 = vunpack.c.l.b16 %v239
    %v375 = vunpack.c.l.b16 %v240
    %v376 = vunpack.c.l.b16 %v241
    %v377 = vunpack.c.l.b16 %v242
    %v378 = vunpack.c.l.b16 %v243
    %v379 = vunpack.c.l.b16 %v244
    %v380 = vunpack.c.l.b16 %v245
    %v381 = vunpack.c.l.b16 %v246
    %v382 = vunpack.c.l.b16 %v247
    %v383 = vunpack.c.l.b16 %v248
    %v384 = vunpack.c.l.b16 %v249
    %v385 = vunpack.c.l.b16 %v250
    %v386 = vunpack.c.l.b16 %v251
    %v387 = vunpack.c.l.b16 %v252
    %v388 = vunpack.c.l.b16 %v253
    %v389 = vunpack.c.l.b16 %v254
    %v390 = vunpack.c.l.b16 %v255
    %v391 = vunpack.c.l.b16 %v256
    %v392 = vunpack.c.l.b16 %v257
    %v393 = vunpack.c.l.b16 %v258
    %v394 = vunpack.c.l.b16 %v259
    %v395 = vunpack.c.l.b16 %v260
    %v396 = vunpack.c.l.b16 %v261
    %v397 = vunpack.c.l.b16 %v262
    %v398 = vunpack.c.l.b16 %v263
    %v399 = vunpack.c.l.b16 %v264
    %v400 = vunpack.c.l.b16 %v265
    %v401 = vunpack.c.l.b16 %v266
    %v402 = vunpack.c.l.b16 %v267
    %v403 = vunpack.c.l.b16 %v268
    %v404 = vunpack.c.l.b16 %v269
    %v405 = vunpack.c.l.b16 %v270
    %v406 = vunpack.c.l.b16 %v271
    %v407 = vunpack.c.l.b16 %v272
    %v408 = vunpack.c.l.b16 %v273
    %v409 = vunpack.c.l.b16 %v274
    %v410 = vunpack.c.l.b16 %v275
    %v411 = vunpack.c.l.b16 %v276
    %v412 = vunpack.c.l.b16 %v277
    %v413 = vunpack.c.l.b16 %v278
    %v414 = vpack.c.b16 %v351, %v350
    %v415 = vpack.c.b16 %v353, %v352
    %v416 = vpack.c.b16 %v355, %v354
    %v417 = vpack.c.b16 %v357, %v356
    %v418 = vpack.c.b16 %v359, %v358
    %v419 = vpack.c.b16 %v361, %v360
    %v420 = vpack.c.b16 %v363, %v362
    %v421 = vpack.c.b16 %v365, %v364
    %v422 = vpack.c.b16 %v367, %v366
    %v423 = vpack.c.b16 %v369, %v368
    %v424 = vpack.c.b16 %v371, %v370
    %v425 = vpack.c.b16 %v373, %v372
    %v426 = vpack.c.b16 %v375, %v374
    %v427 = vpack.c.b16 %v377, %v376
    %v428 = vpack.c.b16 %v379, %v378
    %v429 = vpack.c.b16 %v381, %v380
    %v430 = vpack.c.b16 %v383, %v382
    %v431 = vpack.c.b16 %v385, %v384
    %v432 = vpack.c.b16 %v387, %v386
    %v433 = vpack.c.b16 %v389, %v388
    %v434 = vpack.c.b16 %v391, %v390
    %v435 = vpack.c.b16 %v393, %v392
    %v436 = vpack.c.b16 %v395, %v394
    %v437 = vpack.c.b16 %v397, %v396
    %v438 = vpack.c.b16 %v399, %v398
    %v439 = vpack.c.b16 %v401, %v400
    %v440 = vpack.c.b16 %v403, %v402
    %v441 = vpack.c.b16 %v405, %v404
    %v442 = vpack.c.b16 %v407, %v406
    %v443 = vpack.c.b16 %v409, %v408
    %v444 = vpack.c.b16 %v411, %v410
    %v445 = vpack.c.b16 %v413, %v412
    %478 = vmatprep.subr.bf16.mxu0 0
    %479 = vmatpush1.bf16.msra.mxu0 %v421
    %480 = vmatprep.subr.bf16.mxu0 0
    %481 = vmatpush1.bf16.msra.mxu0 %v420
    %482 = vmatprep.subr.bf16.mxu0 0
    %483 = vmatpush1.bf16.msra.mxu0 %v419
    %484 = vmatprep.subr.bf16.mxu0 0
    %485 = vmatpush1.bf16.msra.mxu0 %v418
    %486 = vmatprep.subr.bf16.mxu0 0
    %487 = vmatpush1.bf16.msra.mxu0 %v417
    %488 = vmatprep.subr.bf16.mxu0 0
    %489 = vmatpush1.bf16.msra.mxu0 %v416
    %490 = vmatprep.subr.bf16.mxu0 0
    %491 = vmatpush1.bf16.msra.mxu0 %v415
    %492 = vmatprep.subr.bf16.mxu0 0
    %493 = vmatpush1.bf16.msra.mxu0 %v414
    %494 = vmatprep.subr.bf16.mxu0 0
    %495 = vmatpush2.bf16.msra.mxu0 %v429
    %496 = vmatprep.subr.bf16.mxu0 0
    %497 = vmatpush2.bf16.msra.mxu0 %v428
    %498 = vmatprep.subr.bf16.mxu0 0
    %499 = vmatpush2.bf16.msra.mxu0 %v427
    %500 = vmatprep.subr.bf16.mxu0 0
    %501 = vmatpush2.bf16.msra.mxu0 %v426
    %502 = vmatprep.subr.bf16.mxu0 0
    %503 = vmatpush2.bf16.msra.mxu0 %v425
    %504 = vmatprep.subr.bf16.mxu0 0
    %505 = vmatpush2.bf16.msra.mxu0 %v424
    %506 = vmatprep.subr.bf16.mxu0 0
    %507 = vmatpush2.bf16.msra.mxu0 %v423
    %508 = vmatprep.subr.bf16.mxu0 0
    %509 = vmatpush2.bf16.msra.mxu0 %v422
    %510 = vmatprep.mubr.bf16.mxu0 %v212
    %511 = vmatmul.mubr.bf16.gmra.mxu0 %v211
    %v512 = vpop.f32.mrf.mxu0
    %v513 = vadd.f32 %v284, %v512
    %v514 = vpop.f32.mrf.mxu0
    %v515 = vpop.f32.mrf.mxu0
    %v516 = vpop.f32.mrf.mxu0
    %517 = vdwg.mxu0
    %518 = vmatprep.subr.bf16.mxu0 0
    %519 = vmatpush1.bf16.msra.mxu0 %v437
    %520 = vmatprep.subr.bf16.mxu0 0
    %521 = vmatpush1.bf16.msra.mxu0 %v436
    %522 = vmatprep.subr.bf16.mxu0 0
    %523 = vmatpush1.bf16.msra.mxu0 %v435
    %524 = vmatprep.subr.bf16.mxu0 0
    %525 = vmatpush1.bf16.msra.mxu0 %v434
    %526 = vmatprep.subr.bf16.mxu0 0
    %527 = vmatpush1.bf16.msra.mxu0 %v433
    %528 = vmatprep.subr.bf16.mxu0 0
    %529 = vmatpush1.bf16.msra.mxu0 %v432
    %530 = vmatprep.subr.bf16.mxu0 0
    %531 = vmatpush1.bf16.msra.mxu0 %v431
    %532 = vmatprep.subr.bf16.mxu0 0
    %533 = vmatpush1.bf16.msra.mxu0 %v430
    %534 = vmatprep.subr.bf16.mxu0 0
    %535 = vmatpush2.bf16.msra.mxu0 %v445
    %536 = vmatprep.subr.bf16.mxu0 0
    %537 = vmatpush2.bf16.msra.mxu0 %v444
    %538 = vmatprep.subr.bf16.mxu0 0
    %539 = vmatpush2.bf16.msra.mxu0 %v443
    %540 = vmatprep.subr.bf16.mxu0 0
    %541 = vmatpush2.bf16.msra.mxu0 %v442
    %542 = vmatprep.subr.bf16.mxu0 0
    %543 = vmatpush2.bf16.msra.mxu0 %v441
    %544 = vmatprep.subr.bf16.mxu0 0
    %545 = vmatpush2.bf16.msra.mxu0 %v440
    %546 = vmatprep.subr.bf16.mxu0 0
    %547 = vmatpush2.bf16.msra.mxu0 %v439
    %548 = vmatprep.subr.bf16.mxu0 0
    %549 = vmatpush2.bf16.msra.mxu0 %v438
    %550 = vmatprep.mubr.bf16.mxu0 %v214
    %551 = vmatmul.mubr.bf16.gmra.mxu0 %v213
    %v552 = vpop.f32.mrf.mxu0
    %v553 = vadd.f32 %v513, %v552
    %v554 = vpop.f32.mrf.mxu0
    %v555 = vpop.f32.mrf.mxu0
    %v556 = vpop.f32.mrf.mxu0
    %557 = vdwg.mxu0
    %v558 = vtanh.pop %v553
    %v559 = vmul.f32 %v558, 2.0
    %vm560 = vcmask 64512
    %561 = vst.msk [vmem:[#allocation10] sm:$0xff] %vm560, %v559
    // Predicated region
    $region38: #{actor_forward.1} parent=1 // pred_check
      _
    $region39: #{actor_forward.1} parent=1 // pred_check_branch
      %563 = sbr.rel (0) target = $region41
    $region40: #{actor_forward.1} parent=1 // pred_region
      %s565 = ssub.s32 128, 128
      %566 = vsyncadd [#allocation4], %s565
      %s568 = sshll.u32 [#allocation10], 4
      %s569 = int_to_ptr.vmem [resolvable:$true] %s568
      %571 = dma.vmem_to_hbm [thread:$0]  %s569, 128, %s5, [#allocation4]
    $region41: #{actor_forward.1} parent=1 // pred_fallthru
      _
    // Predicated region
    $region42: #{actor_forward.1} parent=1 // pred_check
      _
    $region43: #{actor_forward.1} parent=1 // pred_check_branch
      %573 = sbr.rel (0) target = $region45
    $region44: #{actor_forward.1} parent=1 // pred_region
      %574 = dma.done [#allocation4], 128
    $region45: #{actor_forward.1} parent=1 // pred_fallthru
      _
    %575 = vsyncpa [#allocation3], 1
    %576 = vsyncpa [#allocation6], 1
    %577 = vsyncpa [#allocation9], 1
    %578 = vsyncpa [#allocation4], 1

</llo_original>
